<compile_context>
chip_gen: v6e
topology: v6e:2x2x1
jax: 0.10.0
libtpu: 0.0.40
codegen_flags: <defaults>
</compile_context>

<pallas_src>
import math
import functools

import jax
import jax.numpy as jnp
from jax.experimental import pallas as pl
from jax.experimental.pallas import tpu as pltpu


_INV_SQRT2 = 1.0 / math.sqrt(2.0)


def _gelu_exact(h):
    # Exact erf GELU, matching nn.GELU() default semantics.
    # (On v5e a tanh-approx GELU would move work to the free EUP slot, but it
    #  changes numerics slightly, so we keep erf.)
    return 0.5 * h * (1.0 + jax.lax.erf(h * _INV_SQRT2))


# ----------------------------------------------------------------------------
# Kernels
# ----------------------------------------------------------------------------

def ffn_kernel_resident(x_ref, w1_ref, b1_ref, w2_ref, b2_ref, o_ref):
    # x_ref: (tm, D) native dtype; w1_ref: (D, F) bf16; b1_ref: (1, F) f32
    # w2_ref: (F, D) bf16; b2_ref: (1, D) f32; o_ref: (tm, D)
    x = x_ref[...].astype(jnp.bfloat16)
    h = jnp.dot(x, w1_ref[...].astype(jnp.bfloat16),
                preferred_element_type=jnp.float32) + b1_ref[...]
    h = _gelu_exact(h)
    # Dropout -> identity (eval mode).
    out = jnp.dot(h.astype(jnp.bfloat16), w2_ref[...].astype(jnp.bfloat16),
                  preferred_element_type=jnp.float32) + b2_ref[...]
    o_ref[...] = out.astype(o_ref.dtype)


def ffn_kernel_tiled_acc_out(x_ref, w1_ref, b1_ref, w2_ref, b2_ref, o_ref):
    # dim_ffn-tiled path, f32 output: accumulate directly into o_ref
    # (output block index is constant over the f axis, so it is resident).
    f = pl.program_id(1)

    @pl.when(f == 0)
    def _():
        o_ref[...] = jnp.broadcast_to(b2_ref[...], o_ref.shape)

    x = x_ref[...].astype(jnp.bfloat16)
    h = jnp.dot(x, w1_ref[...].astype(jnp.bfloat16),
                preferred_element_type=jnp.float32) + b1_ref[...]
    h = _gelu_exact(h)
    o_ref[...] += jnp.dot(h.astype(jnp.bfloat16), w2_ref[...].astype(jnp.bfloat16),
                          preferred_element_type=jnp.float32)


def ffn_kernel_tiled_scratch(x_ref, w1_ref, b1_ref, w2_ref, b2_ref, o_ref, acc_ref):
    # dim_ffn-tiled path for non-f32 outputs: f32 scratch accumulator.
    f = pl.program_id(1)

    @pl.when(f == 0)
    def _():
        acc_ref[...] = jnp.zeros_like(acc_ref)

    x = x_ref[...].astype(jnp.bfloat16)
    h = jnp.dot(x, w1_ref[...].astype(jnp.bfloat16),
                preferred_element_type=jnp.float32) + b1_ref[...]
    h = _gelu_exact(h)
    acc_ref[...] += jnp.dot(h.astype(jnp.bfloat16), w2_ref[...].astype(jnp.bfloat16),
                            preferred_element_type=jnp.float32)

    @pl.when(f == pl.num_programs(1) - 1)
    def _():
        o_ref[...] = (acc_ref[...] + b2_ref[...]).astype(o_ref.dtype)


# ----------------------------------------------------------------------------
# Sizing helpers (run at trace time on Python ints)
# ----------------------------------------------------------------------------

def _round_up(x, m):
    return (x + m - 1) // m * m


def _cdiv(a, b):
    return -(-a // b)


def _vmem_budget_bytes():
    """~70% of per-core VMEM: leaves headroom for compiler scratch/double-buffers
    (v7x: 64 MiB -> ~45 MiB; v5e/v6e: 128 MiB -> ~90 MiB)."""
    cap = 128 << 20
    try:
        info = pltpu.get_tpu_info()
        cap = int(getattr(info, "vmem_capacity_bytes", cap))
    except Exception:
        pass
    return int(cap * 0.7)


def _vmem_resident_bytes(tm, D, F, x_bytes, out_bytes, w_bytes):
    weights = 2 * 2 * D * F * w_bytes        # W1 + W2 (conservatively x2 buffers)
    biases = 2 * (F + D) * 4
    x_blk = 2 * tm * D * x_bytes             # double-buffered x tile
    o_blk = 2 * tm * D * out_bytes           # double-buffered out tile
    interm = tm * F * (4 + 2)                # h (f32) + bf16 copy for 2nd matmul
    return weights + biases + x_blk + o_blk + interm


def _vmem_tiled_bytes(tm, tf, D, F, x_bytes, out_bytes, w_bytes, use_scratch):
    weights = 2 * 2 * D * tf * w_bytes       # W1/W2 slices, double-buffered
    biases = 2 * (tf + D) * 4
    x_blk = 2 * tm * D * x_bytes
    o_blk = 2 * tm * D * out_bytes
    acc = tm * D * 4 if use_scratch else 0
    interm = tm * tf * (4 + 2)
    return weights + biases + x_blk + o_blk + acc + interm


def _select_row_tile(M, fits_fn, target=512):
    """Largest row tile (multiple of 8) that fits the VMEM budget; keeps >= 2 row
    tiles when possible so the 'parallel' axis shards across v7x's 2 TensorCores."""
    M8 = _round_up(M, 8)
    tm = min(_round_up(target, 8), M8)
    if M8 > 8 and _cdiv(M8, tm) < 2:
        tm = _round_up(_cdiv(M8, 2), 8)
    while tm > 8 and not fits_fn(tm):
        tm = max(8, _round_up(tm // 2, 8))
    return tm if fits_fn(tm) else None


def _pick_ffn_tile(F, target=1024):
    """Largest divisor of F not exceeding `target`, preferring multiples of 256
    (MXU width on v6e/v7x), falling back to multiples of 128, else the full dim."""
    if F <= target:
        return F
    for step in (256, 128):
        start = (min(target, F) // step) * step
        for cand in range(start, step - 1, -step):
            if F % cand == 0:
                return cand
    return F


# ----------------------------------------------------------------------------
# Wrapper
# ----------------------------------------------------------------------------

@functools.partial(jax.jit, static_argnames=("row_tile", "force_tiled"))
def feed_forward(x, w1, b1, w2, b2, *, row_tile=512, force_tiled=False):
    """x: [batch, seq, dim_model]. Returns same shape/dtype.
    w1: [dim_model, dim_ffn] (ideally bf16), b1: [dim_ffn] or [1, dim_ffn],
    w2: [dim_ffn, dim_model] (ideally bf16), b2: [dim_model] or [1, dim_model].
    Use prepare_ffn_params() once at init to avoid per-call weight casts."""
    batch, seq, D = x.shape
    F = w1.shape[1]
    M = batch * seq
    out_dtype = x.dtype

    x_bytes = jnp.dtype(x.dtype).itemsize
    out_bytes = jnp.dtype(out_dtype).itemsize
    w_bytes = jnp.dtype(w1.dtype).itemsize

    budget = _vmem_budget_bytes()

    # Biases: tiny, safe to normalize per call.
    b1_2d = b1.reshape(1, F).astype(jnp.float32)
    b2_2d = b2.reshape(1, D).astype(jnp.float32)

    x2d = x.reshape(M, D)

    # --- choose path & tiles (all static, trace-time Python) -----------------
    use_resident = not force_tiled
    tm = None
    if use_resident:
        tm = _select_row_tile(
            M, lambda t: _vmem_resident_bytes(t, D, F, x_bytes, out_bytes, w_bytes) <= budget,
            target=row_tile)
        use_resident = tm is not None

    if not use_resident:
        tf_target = 128 if force_tiled else 1024
        tf = _pick_ffn_tile(F, target=tf_target)
        use_scratch = jnp.dtype(out_dtype) != jnp.dtype(jnp.float32)
        tm = _select_row_tile(
            M, lambda t: _vmem_tiled_bytes(t, tf, D, F, x_bytes, out_bytes,
                                           w_bytes, use_scratch) <= budget,
            target=row_tile)
        if tm is None:
            tm = 8

    M_pad = _round_up(M, tm)
    if M_pad != M:
        # TODO(synk): for very large M, mask the ragged tail in-kernel instead of
        # materializing a padded copy of x in HBM.
        x2d = jnp.pad(x2d, ((0, M_pad - M), (0, 0)))
    n_row_tiles = M_pad // tm

    weight_passes = 1 if use_resident else n_row_tiles
    cost = pl.CostEstimate(
        flops=4 * M_pad * D * F,                      # two matmuls
        transcendentals=M_pad * F,                    # erf
        bytes_accessed=(M_pad * D * (x_bytes + out_bytes)
                        + 2 * D * F * w_bytes * weight_passes
                        + (F + D) * 4),
    )

    if use_resident:
        out2d = pl.pallas_call(
            ffn_kernel_resident,
            out_shape=jax.ShapeDtypeStruct((M_pad, D), out_dtype),
            grid_spec=pltpu.PrefetchScalarGridSpec(
                num_scalar_prefetch=0,
                grid=(n_row_tiles,),
                in_specs=[
                    pl.BlockSpec((tm, D), lambda i: (i, 0)),    # x rows
                    pl.BlockSpec((D, F), lambda i: (0, 0)),     # W1 (resident)
                    pl.BlockSpec((1, F), lambda i: (0, 0)),     # b1 (resident)
                    pl.BlockSpec((F, D), lambda i: (0, 0)),     # W2 (resident)
                    pl.BlockSpec((1, D), lambda i: (0, 0)),     # b2 (resident)
                ],
                out_specs=pl.BlockSpec((tm, D), lambda i: (i, 0)),
            ),
            compiler_params=pltpu.CompilerParams(
                dimension_semantics=("parallel",),
                vmem_limit_bytes=budget,
            ),
            cost_estimate=cost,
        )(x2d, w1, b1_2d, w2, b2_2d)
    else:
        kernel = ffn_kernel_tiled_scratch if use_scratch else ffn_kernel_tiled_acc_out
        scratch = [pltpu.VMEM((tm, D), jnp.float32)] if use_scratch else []
        out2d = pl.pallas_call(
            kernel,
            out_shape=jax.ShapeDtypeStruct((M_pad, D), out_dtype),
            grid_spec=pltpu.PrefetchScalarGridSpec(
                num_scalar_prefetch=0,
                grid=(n_row_tiles, F // tf),
                in_specs=[
                    pl.BlockSpec((tm, D), lambda i, f: (i, 0)),   # x rows (const over f)
                    pl.BlockSpec((D, tf), lambda i, f: (0, f)),   # W1 slice
                    pl.BlockSpec((1, tf), lambda i, f: (0, f)),   # b1 slice
                    pl.BlockSpec((tf, D), lambda i, f: (f, 0)),   # W2 slice
                    pl.BlockSpec((1, D), lambda i, f: (0, 0)),    # b2 (grid-invariant)
                ],
                out_specs=pl.BlockSpec((tm, D), lambda i, f: (i, 0)),
                scratch_shapes=scratch,
            ),
            compiler_params=pltpu.CompilerParams(
                dimension_semantics=("parallel", "arbitrary"),
                vmem_limit_bytes=budget,
            ),
            cost_estimate=cost,
        )(x2d, w1, b1_2d, w2, b2_2d)

    if M_pad != M:
        out2d = out2d[:M]
    return out2d.reshape(batch, seq, D)


# ----------------------------------------------------------------------------
# Params / references
# ----------------------------------------------------------------------------

def prepare_ffn_params(w1, b1, w2, b2):
    """One-time (init-time) conversion to the kernel's persistent storage format:
    weights [in, out] in bf16 (no per-call HBM-rewriting casts), biases (1, out) f32."""
    return (w1.astype(jnp.bfloat16), b1.astype(jnp.float32).reshape(1, -1),
            w2.astype(jnp.bfloat16), b2.astype(jnp.float32).reshape(1, -1))


def init_linear_params(key, in_features, out_features, dtype=jnp.float32):
    """Deterministic init mimicking nn.Linear defaults. Returns W as [in, out]."""
    k_w, k_b = jax.random.split(key)
    bound_w = math.sqrt(6.0 / in_features)  # kaiming_uniform(a=sqrt(5)) bound
    w = jax.random.uniform(k_w, (in_features, out_features), dtype,
                           minval=-bound_w, maxval=bound_w)
    bound_b = 1.0 / math.sqrt(in_features)
    b = jax.random.uniform(k_b, (out_features,), dtype,
                           minval=-bound_b, maxval=bound_b)
    return w, b


def reference_feed_forward_f32(x, w1, b1, w2, b2):
    h = x @ w1 + b1
    h = _gelu_exact(h)
    return h @ w2 + b2


def reference_feed_forward_bf16(x, w1, b1, w2, b2):
    """Reference with the same bf16-operand / f32-accumulate math as the kernel."""
    M = x.shape[0] * x.shape[1]
    x2d = x.reshape(M, x.shape[-1]).astype(jnp.bfloat16)
    h = jnp.dot(x2d, w1.astype(jnp.bfloat16),
                preferred_element_type=jnp.float32) + b1
    h = _gelu_exact(h)
    o = jnp.dot(h.astype(jnp.bfloat16), w2.astype(jnp.bfloat16),
                preferred_element_type=jnp.float32) + b2
    return o.reshape(x.shape).astype(x.dtype)


if __name__ == "__main__":
    # Small ViT-like shapes: 197 tokens (cls + 14x14 patches), dim_ffn = 2x dim_model.
    batch, seq = 2, 197
    dim_model, dim_ffn = 128, 256

    key = jax.random.PRNGKey(0)
    kx, k1, k2 = jax.random.split(key, 3)

    x = jax.random.normal(kx, (batch, seq, dim_model), jnp.float32)
    w1, b1 = init_linear_params(k1, dim_model, dim_ffn)
    w2, b2 = init_linear_params(k2, dim_ffn, dim_model)

    # One-time conversion to kernel-friendly dtypes (done at init, not per call).
    w1_p, b1_p, w2_p, b2_p = prepare_ffn_params(w1, b1, w2, b2)

    out = jax.block_until_ready(feed_forward(x, w1_p, b1_p, w2_p, b2_p))
    assert out.shape == x.shape and out.dtype == x.dtype

    # Tight check against a reference using the same bf16-operand math.
    ref_bf16 = reference_feed_forward_bf16(x, w1, b1, w2, b2)
    assert jnp.allclose(out, ref_bf16, atol=1e-2, rtol=1e-2), \
        "mismatch vs bf16-aware JAX reference (resident path)"

    # Loose sanity check against the exact f32 module semantics.
    ref_f32 = reference_feed_forward_f32(x, w1, b1, w2, b2)
    assert jnp.allclose(out, ref_f32, atol=1e-1, rtol=1e-1), \
        "mismatch vs f32 JAX reference"

    # Also exercise the dim_ffn-tiled fallback path (used when resident weights
    # would exceed the VMEM budget for large models).
    out_tiled = jax.block_until_ready(
        feed_forward(x, w1_p, b1_p, w2_p, b2_p, force_tiled=True))
    assert jnp.allclose(out_tiled, ref_bf16, atol=1e-2, rtol=1e-2), \
        "mismatch vs bf16-aware JAX reference (tiled path)"

    print("KERNEL_OK")
</pallas_src>

<mosaic_0001>
module attributes {stable_mosaic.version = 11 : i64} {
  func.func @ffn_kernel_resident(%arg0: i32, %arg1: memref<200x128xf32, #tpu.memory_space<vmem>>, %arg2: memref<128x256xbf16, #tpu.memory_space<vmem>>, %arg3: memref<1x256xf32, #tpu.memory_space<vmem>>, %arg4: memref<256x128xbf16, #tpu.memory_space<vmem>>, %arg5: memref<1x128xf32, #tpu.memory_space<vmem>>, %arg6: memref<200x128xf32, #tpu.memory_space<vmem>>) attributes {dimension_semantics = [#tpu.dimension_semantics<parallel>], iteration_bounds = array<i64: 2>, scalar_prefetch = 0 : i64, scratch_operands = 0 : i64, tpu.core_type = #tpu.core_type<tc>, window_params = [{transform_indices = @transform_0, window_bounds = array<i64: 200, 128>}, {pipeline_mode = #tpu.pipeline_mode<synchronous>, transform_indices = @transform_1, window_bounds = array<i64: 128, 256>}, {pipeline_mode = #tpu.pipeline_mode<synchronous>, transform_indices = @transform_2, window_bounds = array<i64: 1, 256>}, {pipeline_mode = #tpu.pipeline_mode<synchronous>, transform_indices = @transform_3, window_bounds = array<i64: 256, 128>}, {pipeline_mode = #tpu.pipeline_mode<synchronous>, transform_indices = @transform_4, window_bounds = array<i64: 1, 128>}, {transform_indices = @transform_5, window_bounds = array<i64: 200, 128>}]} {
    %c0 = arith.constant 0 : index
    %c0_0 = arith.constant 0 : index
    %0 = vector.load %arg1[%c0, %c0_0] : memref<200x128xf32, #tpu.memory_space<vmem>>, vector<200x128xf32>
    %1 = arith.truncf %0 : vector<200x128xf32> to vector<200x128xbf16>
    %c0_1 = arith.constant 0 : index
    %c0_2 = arith.constant 0 : index
    %2 = vector.load %arg2[%c0_1, %c0_2] : memref<128x256xbf16, #tpu.memory_space<vmem>>, vector<128x256xbf16>
    %cst = arith.constant dense<0.000000e+00> : vector<200x256xf32>
    %3 = tpu.matmul %1, %2, %cst {dimension_numbers = #tpu.dot_dimension_numbers<[1], [0], [0], [1], [0, 0, 1, 1], [], []>} : vector<200x128xbf16>, vector<128x256xbf16>, vector<200x256xf32> -> vector<200x256xf32>
    %c0_3 = arith.constant 0 : index
    %c0_4 = arith.constant 0 : index
    %4 = vector.load %arg3[%c0_3, %c0_4] : memref<1x256xf32, #tpu.memory_space<vmem>>, vector<1x256xf32>
    %5 = vector.broadcast %4 : vector<1x256xf32> to vector<200x256xf32>
    %6 = arith.addf %3, %5 : vector<200x256xf32>
    %cst_5 = arith.constant 5.000000e-01 : f32
    %7 = vector.broadcast %cst_5 : f32 to vector<200x256xf32>
    %8 = arith.mulf %7, %6 : vector<200x256xf32>
    %cst_6 = arith.constant 0.707106769 : f32
    %9 = vector.broadcast %cst_6 : f32 to vector<200x256xf32>
    %10 = arith.mulf %6, %9 : vector<200x256xf32>
    %11 = math.erf %10 : vector<200x256xf32>
    %cst_7 = arith.constant 1.000000e+00 : f32
    %12 = vector.broadcast %cst_7 : f32 to vector<200x256xf32>
    %13 = arith.addf %12, %11 : vector<200x256xf32>
    %14 = arith.mulf %8, %13 : vector<200x256xf32>
    %15 = arith.truncf %14 : vector<200x256xf32> to vector<200x256xbf16>
    %c0_8 = arith.constant 0 : index
    %c0_9 = arith.constant 0 : index
    %16 = vector.load %arg4[%c0_8, %c0_9] : memref<256x128xbf16, #tpu.memory_space<vmem>>, vector<256x128xbf16>
    %cst_10 = arith.constant dense<0.000000e+00> : vector<200x128xf32>
    %17 = tpu.matmul %15, %16, %cst_10 {dimension_numbers = #tpu.dot_dimension_numbers<[1], [0], [0], [1], [0, 0, 1, 1], [], []>} : vector<200x256xbf16>, vector<256x128xbf16>, vector<200x128xf32> -> vector<200x128xf32>
    %c0_11 = arith.constant 0 : index
    %c0_12 = arith.constant 0 : index
    %18 = vector.load %arg5[%c0_11, %c0_12] : memref<1x128xf32, #tpu.memory_space<vmem>>, vector<1x128xf32>
    %19 = vector.broadcast %18 : vector<1x128xf32> to vector<200x128xf32>
    %20 = arith.addf %17, %19 : vector<200x128xf32>
    %c0_13 = arith.constant 0 : index
    %c0_14 = arith.constant 0 : index
    %21 = vector.load %arg6[%c0_13, %c0_14] : memref<200x128xf32, #tpu.memory_space<vmem>>, vector<200x128xf32>
    tpu.vector_store %arg6[%c0_13, %c0_14], %20 {strides = array<i32>} : memref<200x128xf32, #tpu.memory_space<vmem>>, vector<200x128xf32>,
    return
  }
  func.func @transform_0(%arg0: i32) -> (i32, i32) {
    %c0_i32 = arith.constant 0 : i32
    %c0_i32_0 = arith.constant 0 : i32
    return %arg0, %c0_i32 : i32, i32
  }
  func.func @transform_1(%arg0: i32) -> (i32, i32) {
    %c0_i32 = arith.constant 0 : i32
    %c0_i32_0 = arith.constant 0 : i32
    %c0_i32_1 = arith.constant 0 : i32
    return %c0_i32, %c0_i32_0 : i32, i32
  }
  func.func @transform_2(%arg0: i32) -> (i32, i32) {
    %c0_i32 = arith.constant 0 : i32
    %c0_i32_0 = arith.constant 0 : i32
    %c0_i32_1 = arith.constant 0 : i32
    return %c0_i32, %c0_i32_0 : i32, i32
  }
  func.func @transform_3(%arg0: i32) -> (i32, i32) {
    %c0_i32 = arith.constant 0 : i32
    %c0_i32_0 = arith.constant 0 : i32
    %c0_i32_1 = arith.constant 0 : i32
    return %c0_i32, %c0_i32_0 : i32, i32
  }
  func.func @transform_4(%arg0: i32) -> (i32, i32) {
    %c0_i32 = arith.constant 0 : i32
    %c0_i32_0 = arith.constant 0 : i32
    %c0_i32_1 = arith.constant 0 : i32
    return %c0_i32, %c0_i32_0 : i32, i32
  }
  func.func @transform_5(%arg0: i32) -> (i32, i32) {
    %c0_i32 = arith.constant 0 : i32
    %c0_i32_0 = arith.constant 0 : i32
    return %arg0, %c0_i32 : i32, i32
  }
}

</mosaic_0001>

<llo_original>
// kernel: feed_forward.1
$region0: #{feed_forward.1}
  #allocation0 [shape = 'u32[]', space=smem, size = 0x4, offset = 0x4, fixed_abs, tag = 'smem constant byte address 0x4 - core index']
  #allocation1 [shape = 'u32[144,128]{1,0:T(1,128)}', space=vmem, size = 0x12000, scoped, tag = 'internal scratch']
  %s0 = inlined_call_operand.vmem [shape: f32[400,128], index: 0, kind: input, shape index: {}]
  %s1 = inlined_call_operand.vmem [shape: bf16[128,256], index: 1, kind: input, shape index: {}]
  %s2 = inlined_call_operand.vmem [shape: f32[1,256], index: 2, kind: input, shape index: {}]
  %s3 = inlined_call_operand.vmem [shape: bf16[256,128], index: 3, kind: input, shape index: {}]
  %s4 = inlined_call_operand.vmem [shape: f32[1,128], index: 4, kind: input, shape index: {}]
  %s5 = inlined_call_operand.vmem [shape: f32[400,128], index: 5, kind: output, shape index: {}]
  %s6 = sld [smem:[#allocation0]]
  $region53: #{feed_forward.1} parent=0
    _
  %s8 = ssub.s32 1, %s6
  %s9 = scalar_select 0, %s8, %s6
  loop: start=0, step=1, limit=4
  $region2: #{feed_forward.1} parent=0 // loop_pre_header
    _
  $region3: #{feed_forward.1} parent=0 // loop_header
    %s11 = sphi 0, %s15
    %p12 = scmp.ge.s32.totalorder %s11, 4
    %s21 = sphi 0, %s23
    %s24 = sphi 0, %s21
    %s25 = sphi 0, %s24
    %s41 = sphi 0, %s25
    %s45 = sphi 0, %s45
    %s47 = sphi 0, %s45
    %s48 = sphi 0, %s47
    %s62 = sphi 0, %s48
    %s66 = sphi 0, %s66
    %s68 = sphi 0, %s66
    %s69 = sphi 0, %s68
    %s83 = sphi 0, %s69
    %s87 = sphi 0, %s87
    %s89 = sphi 0, %s87
    %s90 = sphi 0, %s89
    %s104 = sphi 0, %s90
    %s108 = sphi 0, %s108
    %s110 = sphi 0, %s108
    %s111 = sphi 0, %s110
    %s125 = sphi 0, %s111
    %s131 = sphi 0, %s133
    %s134 = sphi 0, %s131
    %s135 = sphi 0, %s134
    %s151 = sphi 0, %s135
  $region4: #{feed_forward.1} parent=0 // loop_header_branch
    %14 = sbr.rel (%p12) target = $region8
  $region5: #{feed_forward.1} parent=0 // loop_body
    %s16 = ssub.s32 %s11, 1
    %s17 = ssub.s32 %s11, 2
    %s18 = sadd.s32 %s11, 1
    %s19 = ssub.s32 %s11, %s18
    %p20 = scmp.eq.s32.totalorder %s19, 0
    %s22 = sadd.s32 %s21, 1
    %s23 = scalar_select %p20, %s21, %s22
    %p26 = pneg %p20
    %p27 = scmp.eq.s32.totalorder %s11, 1
    %p28 = por %p26, %p27
    %p29 = scmp.ne.s32.totalorder %s21, %s24
    %p30 = scmp.eq.s32.totalorder %s11, 0
    %p31 = por %p29, %p30
    %p32 = scmp.ne.s32.totalorder %s21, %s24
    %p33 = scmp.eq.s32.totalorder %s16, 1
    %p34 = por %p32, %p33
    %p35 = scmp.ne.s32.totalorder %s24, %s25
    %p36 = scmp.eq.s32.totalorder %s16, 0
    %p37 = por %p35, %p36
    %p38 = scmp.ne.s32.totalorder %s24, %s25
    %p39 = scmp.eq.s32.totalorder %s17, 1
    %p40 = por %p38, %p39
    %p42 = scmp.ne.s32.totalorder %s25, %s41
    %p43 = scmp.eq.s32.totalorder %s17, 0
    %p44 = por %p42, %p43
    %s46 = sadd.s32 %s45, 1
    %p49 = scmp.eq.s32.totalorder %s11, 1
    %p50 = scmp.ne.s32.totalorder %s45, %s47
    %p51 = scmp.eq.s32.totalorder %s11, 0
    %p52 = por %p50, %p51
    %p53 = scmp.ne.s32.totalorder %s45, %s47
    %p54 = scmp.eq.s32.totalorder %s16, 1
    %p55 = por %p53, %p54
    %p56 = scmp.ne.s32.totalorder %s47, %s48
    %p57 = scmp.eq.s32.totalorder %s16, 0
    %p58 = por %p56, %p57
    %p59 = scmp.ne.s32.totalorder %s47, %s48
    %p60 = scmp.eq.s32.totalorder %s17, 1
    %p61 = por %p59, %p60
    %p63 = scmp.ne.s32.totalorder %s48, %s62
    %p64 = scmp.eq.s32.totalorder %s17, 0
    %p65 = por %p63, %p64
    %s67 = sadd.s32 %s66, 1
    %p70 = scmp.eq.s32.totalorder %s11, 1
    %p71 = scmp.ne.s32.totalorder %s66, %s68
    %p72 = scmp.eq.s32.totalorder %s11, 0
    %p73 = por %p71, %p72
    %p74 = scmp.ne.s32.totalorder %s66, %s68
    %p75 = scmp.eq.s32.totalorder %s16, 1
    %p76 = por %p74, %p75
    %p77 = scmp.ne.s32.totalorder %s68, %s69
    %p78 = scmp.eq.s32.totalorder %s16, 0
    %p79 = por %p77, %p78
    %p80 = scmp.ne.s32.totalorder %s68, %s69
    %p81 = scmp.eq.s32.totalorder %s17, 1
    %p82 = por %p80, %p81
    %p84 = scmp.ne.s32.totalorder %s69, %s83
    %p85 = scmp.eq.s32.totalorder %s17, 0
    %p86 = por %p84, %p85
    %s88 = sadd.s32 %s87, 1
    %p91 = scmp.eq.s32.totalorder %s11, 1
    %p92 = scmp.ne.s32.totalorder %s87, %s89
    %p93 = scmp.eq.s32.totalorder %s11, 0
    %p94 = por %p92, %p93
    %p95 = scmp.ne.s32.totalorder %s87, %s89
    %p96 = scmp.eq.s32.totalorder %s16, 1
    %p97 = por %p95, %p96
    %p98 = scmp.ne.s32.totalorder %s89, %s90
    %p99 = scmp.eq.s32.totalorder %s16, 0
    %p100 = por %p98, %p99
    %p101 = scmp.ne.s32.totalorder %s89, %s90
    %p102 = scmp.eq.s32.totalorder %s17, 1
    %p103 = por %p101, %p102
    %p105 = scmp.ne.s32.totalorder %s90, %s104
    %p106 = scmp.eq.s32.totalorder %s17, 0
    %p107 = por %p105, %p106
    %s109 = sadd.s32 %s108, 1
    %p112 = scmp.eq.s32.totalorder %s11, 1
    %p113 = scmp.ne.s32.totalorder %s108, %s110
    %p114 = scmp.eq.s32.totalorder %s11, 0
    %p115 = por %p113, %p114
    %p116 = scmp.ne.s32.totalorder %s108, %s110
    %p117 = scmp.eq.s32.totalorder %s16, 1
    %p118 = por %p116, %p117
    %p119 = scmp.ne.s32.totalorder %s110, %s111
    %p120 = scmp.eq.s32.totalorder %s16, 0
    %p121 = por %p119, %p120
    %p122 = scmp.ne.s32.totalorder %s110, %s111
    %p123 = scmp.eq.s32.totalorder %s17, 1
    %p124 = por %p122, %p123
    %p126 = scmp.ne.s32.totalorder %s111, %s125
    %p127 = scmp.eq.s32.totalorder %s17, 0
    %p128 = por %p126, %p127
    %s129 = ssub.s32 %s11, %s18
    %p130 = scmp.eq.s32.totalorder %s129, 0
    %s132 = sadd.s32 %s131, 1
    %s133 = scalar_select %p130, %s131, %s132
    %p136 = pneg %p130
    %p137 = scmp.eq.s32.totalorder %s11, 1
    %p138 = por %p136, %p137
    %p139 = scmp.ne.s32.totalorder %s131, %s134
    %p140 = scmp.eq.s32.totalorder %s11, 0
    %p141 = por %p139, %p140
    %p142 = scmp.ne.s32.totalorder %s131, %s134
    %p143 = scmp.eq.s32.totalorder %s16, 1
    %p144 = por %p142, %p143
    %p145 = scmp.ne.s32.totalorder %s134, %s135
    %p146 = scmp.eq.s32.totalorder %s16, 0
    %p147 = por %p145, %p146
    %p148 = scmp.ne.s32.totalorder %s134, %s135
    %p149 = scmp.eq.s32.totalorder %s17, 1
    %p150 = por %p148, %p149
    %p152 = scmp.ne.s32.totalorder %s135, %s151
    %p153 = scmp.eq.s32.totalorder %s17, 0
    %p154 = por %p152, %p153
    %p155 = scmp.le.s32.totalorder 1, %s11
    %p156 = scmp.lt.s32.totalorder %s11, 3
    %p157 = pnand %p155, %p156
    %p158 = pneg %p157
    // Predicated region
    $region9: #{feed_forward.1} parent=5 // pred_check
      _
    $region10: #{feed_forward.1} parent=5 // pred_check_branch
      %160 = sbr.rel (%p157) target = $region12
    $region11: #{feed_forward.1} parent=5 // pred_region
      %s161 = ssub.s32 %s11, 1
      // Predicated region
      $region13: #{feed_forward.1} parent=11 // pred_check
        %p162 = pneg %p58
      $region14: #{feed_forward.1} parent=11 // pred_check_branch
        %164 = sbr.rel (%p162) target = $region16
      $region15: #{feed_forward.1} parent=11 // pred_region
        _
      $region16: #{feed_forward.1} parent=11 // pred_fallthru
        _
      // Predicated region
      $region17: #{feed_forward.1} parent=11 // pred_check
        %p165 = pneg %p79
      $region18: #{feed_forward.1} parent=11 // pred_check_branch
        %167 = sbr.rel (%p165) target = $region20
      $region19: #{feed_forward.1} parent=11 // pred_region
        _
      $region20: #{feed_forward.1} parent=11 // pred_fallthru
        _
      // Predicated region
      $region21: #{feed_forward.1} parent=11 // pred_check
        %p168 = pneg %p100
      $region22: #{feed_forward.1} parent=11 // pred_check_branch
        %170 = sbr.rel (%p168) target = $region24
      $region23: #{feed_forward.1} parent=11 // pred_region
        _
      $region24: #{feed_forward.1} parent=11 // pred_fallthru
        _
      // Predicated region
      $region25: #{feed_forward.1} parent=11 // pred_check
        %p171 = pneg %p121
      $region26: #{feed_forward.1} parent=11 // pred_check_branch
        %173 = sbr.rel (%p171) target = $region28
      $region27: #{feed_forward.1} parent=11 // pred_region
        _
      $region28: #{feed_forward.1} parent=11 // pred_fallthru
        _
    $region12: #{feed_forward.1} parent=5 // pred_fallthru
      _
    %p174 = scmp.lt.s32.totalorder %s11, 2
    // Predicated region
    $region29: #{feed_forward.1} parent=5 // pred_check
      %p175 = pneg %p174
    $region30: #{feed_forward.1} parent=5 // pred_check_branch
      %177 = sbr.rel (%p175) target = $region32
    $region31: #{feed_forward.1} parent=5 // pred_region
      // Predicated region
      $region33: #{feed_forward.1} parent=31 // pred_check
        %p178 = pneg %p31
      $region34: #{feed_forward.1} parent=31 // pred_check_branch
        %180 = sbr.rel (%p178) target = $region36
      $region35: #{feed_forward.1} parent=31 // pred_region
        %s181 = smul.u32 25, %s11
        %p182 = scmp.lt.s32.totalorder %s181, 49
        %s183 = scalar_select %p182, %s181, 49
        %s184 = smul.addr %s183, 8
        %s185 = scalar_lea.vmem %s0, %s184
        %s186 = smul.u32 25, %s11
      $region36: #{feed_forward.1} parent=31 // pred_fallthru
        _
    $region32: #{feed_forward.1} parent=5 // pred_fallthru
      _
    %p187 = scmp.le.s32.totalorder 1, %s11
    %p188 = scmp.lt.s32.totalorder %s11, 3
    %p189 = pnand %p187, %p188
    %p190 = pneg %p189
    // Predicated region
    $region37: #{feed_forward.1} parent=5 // pred_check
      _
    $region38: #{feed_forward.1} parent=5 // pred_check_branch
      %192 = sbr.rel (%p189) target = $region40
    $region39: #{feed_forward.1} parent=5 // pred_region
      %s193 = ssub.s32 %s11, 1
      %s194 = smul.u32 25, %s16
      %p195 = scmp.lt.s32.totalorder %s194, 49
      %s196 = scalar_select %p195, %s194, 49
      %s197 = smul.addr %s196, 8
      %s198 = scalar_lea.vmem %s0, %s197
      %p199 = pneg %p37
      %p200 = pneg %p34
      %p201 = pneg %p58
      %p202 = pneg %p55
      %p203 = pneg %p79
      %p204 = pneg %p76
      %p205 = pneg %p100
      %p206 = pneg %p97
      %p207 = pneg %p121
      %p208 = pneg %p118
      %p209 = pneg %p147
      %p210 = pneg %p144
      %s211 = smul.u32 25, %s16
      %p212 = scmp.lt.s32.totalorder %s211, 49
      %s213 = scalar_select %p212, %s211, 49
      %s214 = smul.addr %s213, 8
      %s215 = scalar_lea.vmem %s5, %s214
      %s216 = smul.u32 25, %s16
      %p217 = scmp.lt.s32.totalorder %s216, 49
      %s218 = scalar_select %p217, %s216, 49
      %s219 = smul.addr %s218, 8
      %s220 = scalar_lea.vmem %s0, %s219
      %s221 = smul.u32 25, %s16
      %s222 = smul.u32 25, %s16
      %p223 = scmp.lt.s32.totalorder %s222, 49
      %s224 = scalar_select %p223, %s222, 49
      %s225 = smul.addr %s224, 8
      %s226 = scalar_lea.vmem %s5, %s225
      %s227 = smul.u32 25, %s16
      %v229 = vld [vmem:[%s220] sm:$0xff]
      %v230 = vld [vmem:[%s220 + $0x8] sm:$0xff]
      %v231 = vld [vmem:[%s220 + $0x10] sm:$0xff]
      %v232 = vld [vmem:[%s220 + $0x18] sm:$0xff]
      %v233 = vld [vmem:[%s220 + $0x20] sm:$0xff]
      %v234 = vld [vmem:[%s220 + $0x28] sm:$0xff]
      %v235 = vld [vmem:[%s220 + $0x30] sm:$0xff]
      %v236 = vld [vmem:[%s220 + $0x38] sm:$0xff]
      %v237 = vld [vmem:[%s220 + $0x40] sm:$0xff]
      %v238 = vld [vmem:[%s220 + $0x48] sm:$0xff]
      %v239 = vld [vmem:[%s220 + $0x50] sm:$0xff]
      %v240 = vld [vmem:[%s220 + $0x58] sm:$0xff]
      %v241 = vld [vmem:[%s220 + $0x60] sm:$0xff]
      %v242 = vld [vmem:[%s220 + $0x68] sm:$0xff]
      %v243 = vld [vmem:[%s220 + $0x70] sm:$0xff]
      %v244 = vld [vmem:[%s220 + $0x78] sm:$0xff]
      %v245 = vld [vmem:[%s220 + $0x80] sm:$0xff]
      %v246 = vld [vmem:[%s220 + $0x88] sm:$0xff]
      %v247 = vld [vmem:[%s220 + $0x90] sm:$0xff]
      %v248 = vld [vmem:[%s220 + $0x98] sm:$0xff]
      %v249 = vld [vmem:[%s220 + $0xa0] sm:$0xff]
      %v250 = vld [vmem:[%s220 + $0xa8] sm:$0xff]
      %v251 = vld [vmem:[%s220 + $0xb0] sm:$0xff]
      %v252 = vld [vmem:[%s220 + $0xb8] sm:$0xff]
      %v253 = vld [vmem:[%s220 + $0xc0] sm:$0xff]
      %v254 = vpack.c.bf16 %v230, %v229
      %v255 = vpack.c.bf16 %v232, %v231
      %v256 = vpack.c.bf16 %v234, %v233
      %v257 = vpack.c.bf16 %v236, %v235
      %v258 = vpack.c.bf16 %v238, %v237
      %v259 = vpack.c.bf16 %v240, %v239
      %v260 = vpack.c.bf16 %v242, %v241
      %v261 = vpack.c.bf16 %v244, %v243
      %v262 = vpack.c.bf16 %v246, %v245
      %v263 = vpack.c.bf16 %v248, %v247
      %v264 = vpack.c.bf16 %v250, %v249
      %v265 = vpack.c.bf16 %v252, %v251
      %v266 = vpack.c.bf16 %v253, %v253
      %v267 = vld [vmem:[%s1] sm:$0xff]
      %v268 = vld [vmem:[%s1 + $0x8] sm:$0xff]
      %v269 = vld [vmem:[%s1 + $0x10] sm:$0xff]
      %v270 = vld [vmem:[%s1 + $0x18] sm:$0xff]
      %v271 = vld [vmem:[%s1 + $0x20] sm:$0xff]
      %v272 = vld [vmem:[%s1 + $0x28] sm:$0xff]
      %v273 = vld [vmem:[%s1 + $0x30] sm:$0xff]
      %v274 = vld [vmem:[%s1 + $0x38] sm:$0xff]
      %v275 = vld [vmem:[%s1 + $0x40] sm:$0xff]
      %v276 = vld [vmem:[%s1 + $0x48] sm:$0xff]
      %v277 = vld [vmem:[%s1 + $0x50] sm:$0xff]
      %v278 = vld [vmem:[%s1 + $0x58] sm:$0xff]
      %v279 = vld [vmem:[%s1 + $0x60] sm:$0xff]
      %v280 = vld [vmem:[%s1 + $0x68] sm:$0xff]
      %v281 = vld [vmem:[%s1 + $0x70] sm:$0xff]
      %v282 = vld [vmem:[%s1 + $0x78] sm:$0xff]
      %v283 = vld [vmem:[%s2] sm:$0x3]
      %v285 = vlaneseq
      %v286 = vshrl.u32 %v285, 7
      %v287 = vsub.s32 0, %v286
      %v288 = vrot.slane %v283, %v287
      %v289 = vlaneseq
      %v290 = vshrl.u32 %v289, 7
      %v291 = vsub.s32 1, %v290
      %v292 = vrot.slane %v283, %v291
      %v311 = vunpack.c.l.b16 %v267
      %v312 = vunpack.c.h.b16 %v267
      %v313 = vunpack.c.l.b16 %v268
      %v314 = vunpack.c.h.b16 %v268
      %v315 = vunpack.c.l.b16 %v269
      %v316 = vunpack.c.h.b16 %v269
      %v317 = vunpack.c.l.b16 %v270
      %v318 = vunpack.c.h.b16 %v270
      %v319 = vunpack.c.l.b16 %v271
      %v320 = vunpack.c.h.b16 %v271
      %v321 = vunpack.c.l.b16 %v272
      %v322 = vunpack.c.h.b16 %v272
      %v323 = vunpack.c.l.b16 %v273
      %v324 = vunpack.c.h.b16 %v273
      %v325 = vunpack.c.l.b16 %v274
      %v326 = vunpack.c.h.b16 %v274
      %v327 = vunpack.c.l.b16 %v275
      %v328 = vunpack.c.h.b16 %v275
      %v329 = vunpack.c.l.b16 %v276
      %v330 = vunpack.c.h.b16 %v276
      %v331 = vunpack.c.l.b16 %v277
      %v332 = vunpack.c.h.b16 %v277
      %v333 = vunpack.c.l.b16 %v278
      %v334 = vunpack.c.h.b16 %v278
      %v335 = vunpack.c.l.b16 %v279
      %v336 = vunpack.c.h.b16 %v279
      %v337 = vunpack.c.l.b16 %v280
      %v338 = vunpack.c.h.b16 %v280
      %v339 = vunpack.c.l.b16 %v281
      %v340 = vunpack.c.h.b16 %v281
      %v341 = vunpack.c.l.b16 %v282
      %v342 = vunpack.c.h.b16 %v282
      %v343 = vpack.c.b16 %v313, %v311
      %v344 = vpack.c.b16 %v314, %v312
      %v345 = vpack.c.b16 %v317, %v315
      %v346 = vpack.c.b16 %v318, %v316
      %v347 = vpack.c.b16 %v321, %v319
      %v348 = vpack.c.b16 %v322, %v320
      %v349 = vpack.c.b16 %v325, %v323
      %v350 = vpack.c.b16 %v326, %v324
      %v351 = vpack.c.b16 %v329, %v327
      %v352 = vpack.c.b16 %v330, %v328
      %v353 = vpack.c.b16 %v333, %v331
      %v354 = vpack.c.b16 %v334, %v332
      %v355 = vpack.c.b16 %v337, %v335
      %v356 = vpack.c.b16 %v338, %v336
      %v357 = vpack.c.b16 %v341, %v339
      %v358 = vpack.c.b16 %v342, %v340
      %375 = vmatprep.subr.bf16.mxu0 %v358
      %376 = vmatpush1.bf16.msra.mxu0 %v357
      %377 = vmatprep.subr.bf16.mxu0 %v356
      %378 = vmatpush1.bf16.msra.mxu0 %v355
      %379 = vmatprep.subr.bf16.mxu0 %v354
      %380 = vmatpush1.bf16.msra.mxu0 %v353
      %381 = vmatprep.subr.bf16.mxu0 %v352
      %382 = vmatpush1.bf16.msra.mxu0 %v351
      %383 = vmatprep.subr.bf16.mxu0 %v350
      %384 = vmatpush1.bf16.msra.mxu0 %v349
      %385 = vmatprep.subr.bf16.mxu0 %v348
      %386 = vmatpush1.bf16.msra.mxu0 %v347
      %387 = vmatprep.subr.bf16.mxu0 %v346
      %388 = vmatpush1.bf16.msra.mxu0 %v345
      %389 = vmatprep.subr.bf16.mxu0 %v344
      %390 = vmatpush1.bf16.msra.mxu0 %v343
      %391 = vmatprep.subr.bf16.mxu0 0
      %392 = vmatpush2.bf16.msra.mxu0 0
      %393 = vmatprep.subr.bf16.mxu0 0
      %394 = vmatpush2.bf16.msra.mxu0 0
      %395 = vmatprep.subr.bf16.mxu0 0
      %396 = vmatpush2.bf16.msra.mxu0 0
      %397 = vmatprep.subr.bf16.mxu0 0
      %398 = vmatpush2.bf16.msra.mxu0 0
      %399 = vmatprep.subr.bf16.mxu0 0
      %400 = vmatpush2.bf16.msra.mxu0 0
      %401 = vmatprep.subr.bf16.mxu0 0
      %402 = vmatpush2.bf16.msra.mxu0 0
      %403 = vmatprep.subr.bf16.mxu0 0
      %404 = vmatpush2.bf16.msra.mxu0 0
      %405 = vmatprep.subr.bf16.mxu0 0
      %406 = vmatpush2.bf16.msra.mxu0 0
      %407 = vmatprep.mubr.bf16.mxu0 0
      %408 = vmatmul.mubr.bf16.gmra.mxu0 %v254
      %v409 = vpop.f32.mrf.mxu0
      %v410 = vadd.f32 %v288, %v409
      %v411 = vpop.f32.mrf.mxu0
      %v412 = vadd.f32 %v292, %v411
      %v413 = vpop.f32.mrf.mxu0
      %v414 = vadd.f32 %v288, %v413
      %v415 = vpop.f32.mrf.mxu0
      %v416 = vadd.f32 %v292, %v415
      %417 = vmatprep.mubr.bf16.mxu0 0
      %418 = vmatmul.mubr.bf16.gmra.mxu0 %v255
      %v419 = vpop.f32.mrf.mxu0
      %v420 = vadd.f32 %v288, %v419
      %v421 = vpop.f32.mrf.mxu0
      %v422 = vadd.f32 %v292, %v421
      %v423 = vpop.f32.mrf.mxu0
      %v424 = vadd.f32 %v288, %v423
      %v425 = vpop.f32.mrf.mxu0
      %v426 = vadd.f32 %v292, %v425
      %427 = vmatprep.mubr.bf16.mxu0 0
      %428 = vmatmul.mubr.bf16.gmra.mxu0 %v256
      %v429 = vpop.f32.mrf.mxu0
      %v430 = vadd.f32 %v288, %v429
      %v431 = vpop.f32.mrf.mxu0
      %v432 = vadd.f32 %v292, %v431
      %v433 = vpop.f32.mrf.mxu0
      %v434 = vadd.f32 %v288, %v433
      %v435 = vpop.f32.mrf.mxu0
      %v436 = vadd.f32 %v292, %v435
      %437 = vmatprep.mubr.bf16.mxu0 0
      %438 = vmatmul.mubr.bf16.gmra.mxu0 %v257
      %v439 = vpop.f32.mrf.mxu0
      %v440 = vadd.f32 %v288, %v439
      %v441 = vpop.f32.mrf.mxu0
      %v442 = vadd.f32 %v292, %v441
      %v443 = vpop.f32.mrf.mxu0
      %v444 = vadd.f32 %v288, %v443
      %v445 = vpop.f32.mrf.mxu0
      %v446 = vadd.f32 %v292, %v445
      %447 = vmatprep.mubr.bf16.mxu0 0
      %448 = vmatmul.mubr.bf16.gmra.mxu0 %v258
      %v449 = vpop.f32.mrf.mxu0
      %v450 = vadd.f32 %v288, %v449
      %v451 = vpop.f32.mrf.mxu0
      %v452 = vadd.f32 %v292, %v451
      %v453 = vpop.f32.mrf.mxu0
      %v454 = vadd.f32 %v288, %v453
      %v455 = vpop.f32.mrf.mxu0
      %v456 = vadd.f32 %v292, %v455
      %457 = vmatprep.mubr.bf16.mxu0 0
      %458 = vmatmul.mubr.bf16.gmra.mxu0 %v259
      %v459 = vpop.f32.mrf.mxu0
      %v460 = vadd.f32 %v288, %v459
      %v461 = vpop.f32.mrf.mxu0
      %v462 = vadd.f32 %v292, %v461
      %v463 = vpop.f32.mrf.mxu0
      %v464 = vadd.f32 %v288, %v463
      %v465 = vpop.f32.mrf.mxu0
      %v466 = vadd.f32 %v292, %v465
      %467 = vmatprep.mubr.bf16.mxu0 0
      %468 = vmatmul.mubr.bf16.gmra.mxu0 %v260
      %v469 = vpop.f32.mrf.mxu0
      %v470 = vadd.f32 %v288, %v469
      %v471 = vpop.f32.mrf.mxu0
      %v472 = vadd.f32 %v292, %v471
      %v473 = vpop.f32.mrf.mxu0
      %v474 = vadd.f32 %v288, %v473
      %v475 = vpop.f32.mrf.mxu0
      %v476 = vadd.f32 %v292, %v475
      %477 = vmatprep.mubr.bf16.mxu0 0
      %478 = vmatmul.mubr.bf16.gmra.mxu0 %v261
      %v479 = vpop.f32.mrf.mxu0
      %v480 = vadd.f32 %v288, %v479
      %v481 = vpop.f32.mrf.mxu0
      %v482 = vadd.f32 %v292, %v481
      %v483 = vpop.f32.mrf.mxu0
      %v484 = vadd.f32 %v288, %v483
      %v485 = vpop.f32.mrf.mxu0
      %v486 = vadd.f32 %v292, %v485
      %487 = vmatprep.mubr.bf16.mxu0 0
      %488 = vmatmul.mubr.bf16.gmra.mxu0 %v262
      %v489 = vpop.f32.mrf.mxu0
      %v490 = vadd.f32 %v288, %v489
      %v491 = vpop.f32.mrf.mxu0
      %v492 = vadd.f32 %v292, %v491
      %v493 = vpop.f32.mrf.mxu0
      %v494 = vadd.f32 %v288, %v493
      %v495 = vpop.f32.mrf.mxu0
      %v496 = vadd.f32 %v292, %v495
      %497 = vmatprep.mubr.bf16.mxu0 0
      %498 = vmatmul.mubr.bf16.gmra.mxu0 %v263
      %v499 = vpop.f32.mrf.mxu0
      %v500 = vadd.f32 %v288, %v499
      %v501 = vpop.f32.mrf.mxu0
      %v502 = vadd.f32 %v292, %v501
      %v503 = vpop.f32.mrf.mxu0
      %v504 = vadd.f32 %v288, %v503
      %v505 = vpop.f32.mrf.mxu0
      %v506 = vadd.f32 %v292, %v505
      %507 = vmatprep.mubr.bf16.mxu0 0
      %508 = vmatmul.mubr.bf16.gmra.mxu0 %v264
      %v509 = vpop.f32.mrf.mxu0
      %v510 = vadd.f32 %v288, %v509
      %v511 = vpop.f32.mrf.mxu0
      %v512 = vadd.f32 %v292, %v511
      %v513 = vpop.f32.mrf.mxu0
      %v514 = vadd.f32 %v288, %v513
      %v515 = vpop.f32.mrf.mxu0
      %v516 = vadd.f32 %v292, %v515
      %517 = vmatprep.mubr.bf16.mxu0 0
      %518 = vmatmul.mubr.bf16.gmra.mxu0 %v265
      %v519 = vpop.f32.mrf.mxu0
      %v520 = vadd.f32 %v288, %v519
      %v521 = vpop.f32.mrf.mxu0
      %v522 = vadd.f32 %v292, %v521
      %v523 = vpop.f32.mrf.mxu0
      %v524 = vadd.f32 %v288, %v523
      %v525 = vpop.f32.mrf.mxu0
      %v526 = vadd.f32 %v292, %v525
      %527 = vmatprep.mubr.bf16.mxu0 0
      %528 = vmatmul.mubr.bf16.gmra.mxu0 %v266
      %v529 = vpop.f32.mrf.mxu0
      %v530 = vadd.f32 %v288, %v529
      %v531 = vpop.f32.mrf.mxu0
      %v532 = vadd.f32 %v292, %v531
      %v533 = vpop.f32.mrf.mxu0
      %v534 = vpop.f32.mrf.mxu0
      %535 = vdwg.mxu0
      %v536 = vmul.f32 %v410, 0.5
      %v537 = vmul.f32 %v412, 0.5
      %v538 = vmul.f32 %v414, 0.5
      %v539 = vmul.f32 %v416, 0.5
      %v540 = vmul.f32 %v420, 0.5
      %v541 = vmul.f32 %v422, 0.5
      %v542 = vmul.f32 %v424, 0.5
      %v543 = vmul.f32 %v426, 0.5
      %v544 = vmul.f32 %v430, 0.5
      %v545 = vmul.f32 %v432, 0.5
      %v546 = vmul.f32 %v434, 0.5
      %v547 = vmul.f32 %v436, 0.5
      %v548 = vmul.f32 %v440, 0.5
      %v549 = vmul.f32 %v442, 0.5
      %v550 = vmul.f32 %v444, 0.5
      %v551 = vmul.f32 %v446, 0.5
      %v552 = vmul.f32 %v450, 0.5
      %v553 = vmul.f32 %v452, 0.5
      %v554 = vmul.f32 %v454, 0.5
      %v555 = vmul.f32 %v456, 0.5
      %v556 = vmul.f32 %v460, 0.5
      %v557 = vmul.f32 %v462, 0.5
      %v558 = vmul.f32 %v464, 0.5
      %v559 = vmul.f32 %v466, 0.5
      %v560 = vmul.f32 %v470, 0.5
      %v561 = vmul.f32 %v472, 0.5
      %v562 = vmul.f32 %v474, 0.5
      %v563 = vmul.f32 %v476, 0.5
      %v564 = vmul.f32 %v480, 0.5
      %v565 = vmul.f32 %v482, 0.5
      %v566 = vmul.f32 %v484, 0.5
      %v567 = vmul.f32 %v486, 0.5
      %v568 = vmul.f32 %v490, 0.5
      %v569 = vmul.f32 %v492, 0.5
      %v570 = vmul.f32 %v494, 0.5
      %v571 = vmul.f32 %v496, 0.5
      %v572 = vmul.f32 %v500, 0.5
      %v573 = vmul.f32 %v502, 0.5
      %v574 = vmul.f32 %v504, 0.5
      %v575 = vmul.f32 %v506, 0.5
      %v576 = vmul.f32 %v510, 0.5
      %v577 = vmul.f32 %v512, 0.5
      %v578 = vmul.f32 %v514, 0.5
      %v579 = vmul.f32 %v516, 0.5
      %v580 = vmul.f32 %v520, 0.5
      %v581 = vmul.f32 %v522, 0.5
      %v582 = vmul.f32 %v524, 0.5
      %v583 = vmul.f32 %v526, 0.5
      %v584 = vmul.f32 %v530, 0.5
      %v585 = vmul.f32 %v532, 0.5
      %v586 = vmul.f32 %v410, 0.70710677
      %v587 = vmul.f32 %v412, 0.70710677
      %v588 = vmul.f32 %v414, 0.70710677
      %v589 = vmul.f32 %v416, 0.70710677
      %v590 = vmul.f32 %v420, 0.70710677
      %v591 = vmul.f32 %v422, 0.70710677
      %v592 = vmul.f32 %v424, 0.70710677
      %v593 = vmul.f32 %v426, 0.70710677
      %v594 = vmul.f32 %v430, 0.70710677
      %v595 = vmul.f32 %v432, 0.70710677
      %v596 = vmul.f32 %v434, 0.70710677
      %v597 = vmul.f32 %v436, 0.70710677
      %v598 = vmul.f32 %v440, 0.70710677
      %v599 = vmul.f32 %v442, 0.70710677
      %v600 = vmul.f32 %v444, 0.70710677
      %v601 = vmul.f32 %v446, 0.70710677
      %v602 = vmul.f32 %v450, 0.70710677
      %v603 = vmul.f32 %v452, 0.70710677
      %v604 = vmul.f32 %v454, 0.70710677
      %v605 = vmul.f32 %v456, 0.70710677
      %v606 = vmul.f32 %v460, 0.70710677
      %v607 = vmul.f32 %v462, 0.70710677
      %v608 = vmul.f32 %v464, 0.70710677
      %v609 = vmul.f32 %v466, 0.70710677
      %v610 = vmul.f32 %v470, 0.70710677
      %v611 = vmul.f32 %v472, 0.70710677
      %v612 = vmul.f32 %v474, 0.70710677
      %v613 = vmul.f32 %v476, 0.70710677
      %v614 = vmul.f32 %v480, 0.70710677
      %v615 = vmul.f32 %v482, 0.70710677
      %v616 = vmul.f32 %v484, 0.70710677
      %v617 = vmul.f32 %v486, 0.70710677
      %v618 = vmul.f32 %v490, 0.70710677
      %v619 = vmul.f32 %v492, 0.70710677
      %v620 = vmul.f32 %v494, 0.70710677
      %v621 = vmul.f32 %v496, 0.70710677
      %v622 = vmul.f32 %v500, 0.70710677
      %v623 = vmul.f32 %v502, 0.70710677
      %v624 = vmul.f32 %v504, 0.70710677
      %v625 = vmul.f32 %v506, 0.70710677
      %v626 = vmul.f32 %v510, 0.70710677
      %v627 = vmul.f32 %v512, 0.70710677
      %v628 = vmul.f32 %v514, 0.70710677
      %v629 = vmul.f32 %v516, 0.70710677
      %v630 = vmul.f32 %v520, 0.70710677
      %v631 = vmul.f32 %v522, 0.70710677
      %v632 = vmul.f32 %v524, 0.70710677
      %v633 = vmul.f32 %v526, 0.70710677
      %v634 = vmul.f32 %v530, 0.70710677
      %v635 = vmul.f32 %v532, 0.70710677
      %v636 = verf.f32.pop %v586
      %v637 = verf.f32.pop %v587
      %v638 = verf.f32.pop %v588
      %v639 = verf.f32.pop %v589
      %v640 = verf.f32.pop %v590
      %v641 = verf.f32.pop %v591
      %v642 = verf.f32.pop %v592
      %v643 = verf.f32.pop %v593
      %v644 = verf.f32.pop %v594
      %v645 = verf.f32.pop %v595
      %v646 = verf.f32.pop %v596
      %v647 = verf.f32.pop %v597
      %v648 = verf.f32.pop %v598
      %v649 = verf.f32.pop %v599
      %v650 = verf.f32.pop %v600
      %v651 = verf.f32.pop %v601
      %v652 = verf.f32.pop %v602
      %v653 = verf.f32.pop %v603
      %v654 = verf.f32.pop %v604
      %v655 = verf.f32.pop %v605
      %v656 = verf.f32.pop %v606
      %v657 = verf.f32.pop %v607
      %v658 = verf.f32.pop %v608
      %v659 = verf.f32.pop %v609
      %v660 = verf.f32.pop %v610
      %v661 = verf.f32.pop %v611
      %v662 = verf.f32.pop %v612
      %v663 = verf.f32.pop %v613
      %v664 = verf.f32.pop %v614
      %v665 = verf.f32.pop %v615
      %v666 = verf.f32.pop %v616
      %v667 = verf.f32.pop %v617
      %v668 = verf.f32.pop %v618
      %v669 = verf.f32.pop %v619
      %v670 = verf.f32.pop %v620
      %v671 = verf.f32.pop %v621
      %v672 = verf.f32.pop %v622
      %v673 = verf.f32.pop %v623
      %v674 = verf.f32.pop %v624
      %v675 = verf.f32.pop %v625
      %v676 = verf.f32.pop %v626
      %v677 = verf.f32.pop %v627
      %v678 = verf.f32.pop %v628
      %v679 = verf.f32.pop %v629
      %v680 = verf.f32.pop %v630
      %v681 = verf.f32.pop %v631
      %v682 = verf.f32.pop %v632
      %v683 = verf.f32.pop %v633
      %v684 = verf.f32.pop %v634
      %v685 = verf.f32.pop %v635
      %v686 = vadd.f32 %v636, 1.0
      %v687 = vadd.f32 %v637, 1.0
      %v688 = vadd.f32 %v638, 1.0
      %v689 = vadd.f32 %v639, 1.0
      %v690 = vadd.f32 %v640, 1.0
      %v691 = vadd.f32 %v641, 1.0
      %v692 = vadd.f32 %v642, 1.0
      %v693 = vadd.f32 %v643, 1.0
      %v694 = vadd.f32 %v644, 1.0
      %v695 = vadd.f32 %v645, 1.0
      %v696 = vadd.f32 %v646, 1.0
      %v697 = vadd.f32 %v647, 1.0
      %v698 = vadd.f32 %v648, 1.0
      %v699 = vadd.f32 %v649, 1.0
      %v700 = vadd.f32 %v650, 1.0
      %v701 = vadd.f32 %v651, 1.0
      %v702 = vadd.f32 %v652, 1.0
      %v703 = vadd.f32 %v653, 1.0
      %v704 = vadd.f32 %v654, 1.0
      %v705 = vadd.f32 %v655, 1.0
      %v706 = vadd.f32 %v656, 1.0
      %v707 = vadd.f32 %v657, 1.0
      %v708 = vadd.f32 %v658, 1.0
      %v709 = vadd.f32 %v659, 1.0
      %v710 = vadd.f32 %v660, 1.0
      %v711 = vadd.f32 %v661, 1.0
      %v712 = vadd.f32 %v662, 1.0
      %v713 = vadd.f32 %v663, 1.0
      %v714 = vadd.f32 %v664, 1.0
      %v715 = vadd.f32 %v665, 1.0
      %v716 = vadd.f32 %v666, 1.0
      %v717 = vadd.f32 %v667, 1.0
      %v718 = vadd.f32 %v668, 1.0
      %v719 = vadd.f32 %v669, 1.0
      %v720 = vadd.f32 %v670, 1.0
      %v721 = vadd.f32 %v671, 1.0
      %v722 = vadd.f32 %v672, 1.0
      %v723 = vadd.f32 %v673, 1.0
      %v724 = vadd.f32 %v674, 1.0
      %v725 = vadd.f32 %v675, 1.0
      %v726 = vadd.f32 %v676, 1.0
      %v727 = vadd.f32 %v677, 1.0
      %v728 = vadd.f32 %v678, 1.0
      %v729 = vadd.f32 %v679, 1.0
      %v730 = vadd.f32 %v680, 1.0
      %v731 = vadd.f32 %v681, 1.0
      %v732 = vadd.f32 %v682, 1.0
      %v733 = vadd.f32 %v683, 1.0
      %v734 = vadd.f32 %v684, 1.0
      %v735 = vadd.f32 %v685, 1.0
      %v736 = vmul.f32 %v536, %v686
      %v737 = vmul.f32 %v537, %v687
      %v738 = vmul.f32 %v538, %v688
      %v739 = vmul.f32 %v539, %v689
      %v740 = vmul.f32 %v540, %v690
      %v741 = vmul.f32 %v541, %v691
      %v742 = vmul.f32 %v542, %v692
      %v743 = vmul.f32 %v543, %v693
      %v744 = vmul.f32 %v544, %v694
      %v745 = vmul.f32 %v545, %v695
      %v746 = vmul.f32 %v546, %v696
      %v747 = vmul.f32 %v547, %v697
      %v748 = vmul.f32 %v548, %v698
      %v749 = vmul.f32 %v549, %v699
      %v750 = vmul.f32 %v550, %v700
      %v751 = vmul.f32 %v551, %v701
      %v752 = vmul.f32 %v552, %v702
      %v753 = vmul.f32 %v553, %v703
      %v754 = vmul.f32 %v554, %v704
      %v755 = vmul.f32 %v555, %v705
      %v756 = vmul.f32 %v556, %v706
      %v757 = vmul.f32 %v557, %v707
      %v758 = vmul.f32 %v558, %v708
      %v759 = vmul.f32 %v559, %v709
      %v760 = vmul.f32 %v560, %v710
      %v761 = vmul.f32 %v561, %v711
      %v762 = vmul.f32 %v562, %v712
      %v763 = vmul.f32 %v563, %v713
      %v764 = vmul.f32 %v564, %v714
      %v765 = vmul.f32 %v565, %v715
      %v766 = vmul.f32 %v566, %v716
      %v767 = vmul.f32 %v567, %v717
      %v768 = vmul.f32 %v568, %v718
      %v769 = vmul.f32 %v569, %v719
      %v770 = vmul.f32 %v570, %v720
      %v771 = vmul.f32 %v571, %v721
      %v772 = vmul.f32 %v572, %v722
      %v773 = vmul.f32 %v573, %v723
      %v774 = vmul.f32 %v574, %v724
      %v775 = vmul.f32 %v575, %v725
      %v776 = vmul.f32 %v576, %v726
      %v777 = vmul.f32 %v577, %v727
      %v778 = vmul.f32 %v578, %v728
      %v779 = vmul.f32 %v579, %v729
      %v780 = vmul.f32 %v580, %v730
      %v781 = vmul.f32 %v581, %v731
      %v782 = vmul.f32 %v582, %v732
      %v783 = vmul.f32 %v583, %v733
      %v784 = vmul.f32 %v584, %v734
      %v785 = vmul.f32 %v585, %v735
      %v786 = vpack.c.bf16 %v738, %v736
      %v787 = vpack.c.bf16 %v739, %v737
      %v788 = vpack.c.bf16 %v742, %v740
      %v789 = vpack.c.bf16 %v743, %v741
      %v790 = vpack.c.bf16 %v746, %v744
      %v791 = vpack.c.bf16 %v747, %v745
      %v792 = vpack.c.bf16 %v750, %v748
      %v793 = vpack.c.bf16 %v751, %v749
      %v794 = vpack.c.bf16 %v754, %v752
      %v795 = vpack.c.bf16 %v755, %v753
      %v796 = vpack.c.bf16 %v758, %v756
      %v797 = vpack.c.bf16 %v759, %v757
      %v798 = vpack.c.bf16 %v762, %v760
      %v799 = vpack.c.bf16 %v763, %v761
      %v800 = vpack.c.bf16 %v766, %v764
      %v801 = vpack.c.bf16 %v767, %v765
      %v802 = vpack.c.bf16 %v770, %v768
      %v803 = vpack.c.bf16 %v771, %v769
      %v804 = vpack.c.bf16 %v774, %v772
      %v805 = vpack.c.bf16 %v775, %v773
      %v806 = vpack.c.bf16 %v778, %v776
      %v807 = vpack.c.bf16 %v779, %v777
      %v808 = vpack.c.bf16 %v782, %v780
      %v809 = vpack.c.bf16 %v783, %v781
      %v810 = vpack.c.bf16 %v784, %v784
      %v811 = vpack.c.bf16 %v785, %v785
      %v812 = vld [vmem:[%s3] sm:$0xf]
      %v813 = vld [vmem:[%s3 + $0x4] sm:$0xf]
      %v814 = vld [vmem:[%s3 + $0x8] sm:$0xf]
      %v815 = vld [vmem:[%s3 + $0xc] sm:$0xf]
      %v816 = vld [vmem:[%s3 + $0x10] sm:$0xf]
      %v817 = vld [vmem:[%s3 + $0x14] sm:$0xf]
      %v818 = vld [vmem:[%s3 + $0x18] sm:$0xf]
      %v819 = vld [vmem:[%s3 + $0x1c] sm:$0xf]
      %v820 = vld [vmem:[%s3 + $0x20] sm:$0xf]
      %v821 = vld [vmem:[%s3 + $0x24] sm:$0xf]
      %v822 = vld [vmem:[%s3 + $0x28] sm:$0xf]
      %v823 = vld [vmem:[%s3 + $0x2c] sm:$0xf]
      %v824 = vld [vmem:[%s3 + $0x30] sm:$0xf]
      %v825 = vld [vmem:[%s3 + $0x34] sm:$0xf]
      %v826 = vld [vmem:[%s3 + $0x38] sm:$0xf]
      %v827 = vld [vmem:[%s3 + $0x3c] sm:$0xf]
      %v828 = vld [vmem:[%s3 + $0x40] sm:$0xf]
      %v829 = vld [vmem:[%s3 + $0x44] sm:$0xf]
      %v830 = vld [vmem:[%s3 + $0x48] sm:$0xf]
      %v831 = vld [vmem:[%s3 + $0x4c] sm:$0xf]
      %v832 = vld [vmem:[%s3 + $0x50] sm:$0xf]
      %v833 = vld [vmem:[%s3 + $0x54] sm:$0xf]
      %v834 = vld [vmem:[%s3 + $0x58] sm:$0xf]
      %v835 = vld [vmem:[%s3 + $0x5c] sm:$0xf]
      %v836 = vld [vmem:[%s3 + $0x60] sm:$0xf]
      %v837 = vld [vmem:[%s3 + $0x64] sm:$0xf]
      %v838 = vld [vmem:[%s3 + $0x68] sm:$0xf]
      %v839 = vld [vmem:[%s3 + $0x6c] sm:$0xf]
      %v840 = vld [vmem:[%s3 + $0x70] sm:$0xf]
      %v841 = vld [vmem:[%s3 + $0x74] sm:$0xf]
      %v842 = vld [vmem:[%s3 + $0x78] sm:$0xf]
      %v843 = vld [vmem:[%s3 + $0x7c] sm:$0xf]
      %v844 = vld [vmem:[%s4] sm:$0x1]
      %v846 = vlaneseq
      %v847 = vshrl.u32 %v846, 7
      %v848 = vsub.s32 0, %v847
      %v849 = vrot.slane %v844, %v848
      %v883 = vunpack.c.l.b16 %v812
      %v884 = vunpack.c.l.b16 %v813
      %v885 = vunpack.c.l.b16 %v814
      %v886 = vunpack.c.l.b16 %v815
      %v887 = vunpack.c.l.b16 %v816
      %v888 = vunpack.c.l.b16 %v817
      %v889 = vunpack.c.l.b16 %v818
      %v890 = vunpack.c.l.b16 %v819
      %v891 = vunpack.c.l.b16 %v820
      %v892 = vunpack.c.l.b16 %v821
      %v893 = vunpack.c.l.b16 %v822
      %v894 = vunpack.c.l.b16 %v823
      %v895 = vunpack.c.l.b16 %v824
      %v896 = vunpack.c.l.b16 %v825
      %v897 = vunpack.c.l.b16 %v826
      %v898 = vunpack.c.l.b16 %v827
      %v899 = vunpack.c.l.b16 %v828
      %v900 = vunpack.c.l.b16 %v829
      %v901 = vunpack.c.l.b16 %v830
      %v902 = vunpack.c.l.b16 %v831
      %v903 = vunpack.c.l.b16 %v832
      %v904 = vunpack.c.l.b16 %v833
      %v905 = vunpack.c.l.b16 %v834
      %v906 = vunpack.c.l.b16 %v835
      %v907 = vunpack.c.l.b16 %v836
      %v908 = vunpack.c.l.b16 %v837
      %v909 = vunpack.c.l.b16 %v838
      %v910 = vunpack.c.l.b16 %v839
      %v911 = vunpack.c.l.b16 %v840
      %v912 = vunpack.c.l.b16 %v841
      %v913 = vunpack.c.l.b16 %v842
      %v914 = vunpack.c.l.b16 %v843
      %v915 = vpack.c.b16 %v884, %v883
      %v916 = vpack.c.b16 %v886, %v885
      %v917 = vpack.c.b16 %v888, %v887
      %v918 = vpack.c.b16 %v890, %v889
      %v919 = vpack.c.b16 %v892, %v891
      %v920 = vpack.c.b16 %v894, %v893
      %v921 = vpack.c.b16 %v896, %v895
      %v922 = vpack.c.b16 %v898, %v897
      %v923 = vpack.c.b16 %v900, %v899
      %v924 = vpack.c.b16 %v902, %v901
      %v925 = vpack.c.b16 %v904, %v903
      %v926 = vpack.c.b16 %v906, %v905
      %v927 = vpack.c.b16 %v908, %v907
      %v928 = vpack.c.b16 %v910, %v909
      %v929 = vpack.c.b16 %v912, %v911
      %v930 = vpack.c.b16 %v914, %v913
      %947 = vmatprep.subr.bf16.mxu0 0
      %948 = vmatpush1.bf16.msra.mxu0 %v922
      %949 = vmatprep.subr.bf16.mxu0 0
      %950 = vmatpush1.bf16.msra.mxu0 %v921
      %951 = vmatprep.subr.bf16.mxu0 0
      %952 = vmatpush1.bf16.msra.mxu0 %v920
      %953 = vmatprep.subr.bf16.mxu0 0
      %954 = vmatpush1.bf16.msra.mxu0 %v919
      %955 = vmatprep.subr.bf16.mxu0 0
      %956 = vmatpush1.bf16.msra.mxu0 %v918
      %957 = vmatprep.subr.bf16.mxu0 0
      %958 = vmatpush1.bf16.msra.mxu0 %v917
      %959 = vmatprep.subr.bf16.mxu0 0
      %960 = vmatpush1.bf16.msra.mxu0 %v916
      %961 = vmatprep.subr.bf16.mxu0 0
      %962 = vmatpush1.bf16.msra.mxu0 %v915
      %963 = vmatprep.subr.bf16.mxu0 0
      %964 = vmatpush2.bf16.msra.mxu0 %v930
      %965 = vmatprep.subr.bf16.mxu0 0
      %966 = vmatpush2.bf16.msra.mxu0 %v929
      %967 = vmatprep.subr.bf16.mxu0 0
      %968 = vmatpush2.bf16.msra.mxu0 %v928
      %969 = vmatprep.subr.bf16.mxu0 0
      %970 = vmatpush2.bf16.msra.mxu0 %v927
      %971 = vmatprep.subr.bf16.mxu0 0
      %972 = vmatpush2.bf16.msra.mxu0 %v926
      %973 = vmatprep.subr.bf16.mxu0 0
      %974 = vmatpush2.bf16.msra.mxu0 %v925
      %975 = vmatprep.subr.bf16.mxu0 0
      %976 = vmatpush2.bf16.msra.mxu0 %v924
      %977 = vmatprep.subr.bf16.mxu0 0
      %978 = vmatpush2.bf16.msra.mxu0 %v923
      %979 = vmatprep.mubr.bf16.mxu0 %v787
      %980 = vmatmul.mubr.bf16.gmra.mxu0 %v786
      %v981 = vpop.f32.mrf.mxu0
      %v982 = vadd.f32 %v849, %v981
      %v983 = vpop.f32.mrf.mxu0
      %v984 = vpop.f32.mrf.mxu0
      %v985 = vadd.f32 %v849, %v984
      %v986 = vpop.f32.mrf.mxu0
      %987 = vmatprep.mubr.bf16.mxu0 %v789
      %988 = vmatmul.mubr.bf16.gmra.mxu0 %v788
      %v989 = vpop.f32.mrf.mxu0
      %v990 = vadd.f32 %v849, %v989
      %v991 = vpop.f32.mrf.mxu0
      %v992 = vpop.f32.mrf.mxu0
      %v993 = vadd.f32 %v849, %v992
      %v994 = vpop.f32.mrf.mxu0
      %995 = vmatprep.mubr.bf16.mxu0 %v791
      %996 = vmatmul.mubr.bf16.gmra.mxu0 %v790
      %v997 = vpop.f32.mrf.mxu0
      %v998 = vadd.f32 %v849, %v997
      %v999 = vpop.f32.mrf.mxu0
      %v1000 = vpop.f32.mrf.mxu0
      %v1001 = vadd.f32 %v849, %v1000
      %v1002 = vpop.f32.mrf.mxu0
      %1003 = vmatprep.mubr.bf16.mxu0 %v793
      %1004 = vmatmul.mubr.bf16.gmra.mxu0 %v792
      %v1005 = vpop.f32.mrf.mxu0
      %v1006 = vadd.f32 %v849, %v1005
      %v1007 = vpop.f32.mrf.mxu0
      %v1008 = vpop.f32.mrf.mxu0
      %v1009 = vadd.f32 %v849, %v1008
      %v1010 = vpop.f32.mrf.mxu0
      %1011 = vmatprep.mubr.bf16.mxu0 %v795
      %1012 = vmatmul.mubr.bf16.gmra.mxu0 %v794
      %v1013 = vpop.f32.mrf.mxu0
      %v1014 = vadd.f32 %v849, %v1013
      %v1015 = vpop.f32.mrf.mxu0
      %v1016 = vpop.f32.mrf.mxu0
      %v1017 = vadd.f32 %v849, %v1016
      %v1018 = vpop.f32.mrf.mxu0
      %1019 = vmatprep.mubr.bf16.mxu0 %v797
      %1020 = vmatmul.mubr.bf16.gmra.mxu0 %v796
      %v1021 = vpop.f32.mrf.mxu0
      %v1022 = vadd.f32 %v849, %v1021
      %v1023 = vpop.f32.mrf.mxu0
      %v1024 = vpop.f32.mrf.mxu0
      %v1025 = vadd.f32 %v849, %v1024
      %v1026 = vpop.f32.mrf.mxu0
      %1027 = vmatprep.mubr.bf16.mxu0 %v799
      %1028 = vmatmul.mubr.bf16.gmra.mxu0 %v798
      %v1029 = vpop.f32.mrf.mxu0
      %v1030 = vadd.f32 %v849, %v1029
      %v1031 = vpop.f32.mrf.mxu0
      %v1032 = vpop.f32.mrf.mxu0
      %v1033 = vadd.f32 %v849, %v1032
      %v1034 = vpop.f32.mrf.mxu0
      %1035 = vmatprep.mubr.bf16.mxu0 %v801
      %1036 = vmatmul.mubr.bf16.gmra.mxu0 %v800
      %v1037 = vpop.f32.mrf.mxu0
      %v1038 = vadd.f32 %v849, %v1037
      %v1039 = vpop.f32.mrf.mxu0
      %v1040 = vpop.f32.mrf.mxu0
      %v1041 = vadd.f32 %v849, %v1040
      %v1042 = vpop.f32.mrf.mxu0
      %1043 = vmatprep.mubr.bf16.mxu0 %v803
      %1044 = vmatmul.mubr.bf16.gmra.mxu0 %v802
      %v1045 = vpop.f32.mrf.mxu0
      %v1046 = vadd.f32 %v849, %v1045
      %v1047 = vpop.f32.mrf.mxu0
      %v1048 = vpop.f32.mrf.mxu0
      %v1049 = vadd.f32 %v849, %v1048
      %v1050 = vpop.f32.mrf.mxu0
      %1051 = vmatprep.mubr.bf16.mxu0 %v805
      %1052 = vmatmul.mubr.bf16.gmra.mxu0 %v804
      %v1053 = vpop.f32.mrf.mxu0
      %v1054 = vadd.f32 %v849, %v1053
      %v1055 = vpop.f32.mrf.mxu0
      %v1056 = vpop.f32.mrf.mxu0
      %v1057 = vadd.f32 %v849, %v1056
      %v1058 = vpop.f32.mrf.mxu0
      %1059 = vmatprep.mubr.bf16.mxu0 %v807
      %1060 = vmatmul.mubr.bf16.gmra.mxu0 %v806
      %v1061 = vpop.f32.mrf.mxu0
      %v1062 = vadd.f32 %v849, %v1061
      %v1063 = vpop.f32.mrf.mxu0
      %v1064 = vpop.f32.mrf.mxu0
      %v1065 = vadd.f32 %v849, %v1064
      %v1066 = vpop.f32.mrf.mxu0
      %1067 = vmatprep.mubr.bf16.mxu0 %v809
      %1068 = vmatmul.mubr.bf16.gmra.mxu0 %v808
      %v1069 = vpop.f32.mrf.mxu0
      %v1070 = vadd.f32 %v849, %v1069
      %v1071 = vpop.f32.mrf.mxu0
      %v1072 = vpop.f32.mrf.mxu0
      %v1073 = vadd.f32 %v849, %v1072
      %v1074 = vpop.f32.mrf.mxu0
      %1075 = vmatprep.mubr.bf16.mxu0 %v811
      %1076 = vmatmul.mubr.bf16.gmra.mxu0 %v810
      %v1077 = vpop.f32.mrf.mxu0
      %v1078 = vadd.f32 %v849, %v1077
      %v1079 = vpop.f32.mrf.mxu0
      %v1080 = vpop.f32.mrf.mxu0
      %v1081 = vpop.f32.mrf.mxu0
      %1082 = vdwg.mxu0
      %1083 = vst [vmem:[%s226] sm:$0xff] %v982
      %1084 = vst [vmem:[%s226 + $0x8] sm:$0xff] %v985
      %1085 = vst [vmem:[%s226 + $0x10] sm:$0xff] %v990
      %1086 = vst [vmem:[%s226 + $0x18] sm:$0xff] %v993
      %1087 = vst [vmem:[%s226 + $0x20] sm:$0xff] %v998
      %1088 = vst [vmem:[%s226 + $0x28] sm:$0xff] %v1001
      %1089 = vst [vmem:[%s226 + $0x30] sm:$0xff] %v1006
      %1090 = vst [vmem:[%s226 + $0x38] sm:$0xff] %v1009
      %1091 = vst [vmem:[%s226 + $0x40] sm:$0xff] %v1014
      %1092 = vst [vmem:[%s226 + $0x48] sm:$0xff] %v1017
      %1093 = vst [vmem:[%s226 + $0x50] sm:$0xff] %v1022
      %1094 = vst [vmem:[%s226 + $0x58] sm:$0xff] %v1025
      %1095 = vst [vmem:[%s226 + $0x60] sm:$0xff] %v1030
      %1096 = vst [vmem:[%s226 + $0x68] sm:$0xff] %v1033
      %1097 = vst [vmem:[%s226 + $0x70] sm:$0xff] %v1038
      %1098 = vst [vmem:[%s226 + $0x78] sm:$0xff] %v1041
      %1099 = vst [vmem:[%s226 + $0x80] sm:$0xff] %v1046
      %1100 = vst [vmem:[%s226 + $0x88] sm:$0xff] %v1049
      %1101 = vst [vmem:[%s226 + $0x90] sm:$0xff] %v1054
      %1102 = vst [vmem:[%s226 + $0x98] sm:$0xff] %v1057
      %1103 = vst [vmem:[%s226 + $0xa0] sm:$0xff] %v1062
      %1104 = vst [vmem:[%s226 + $0xa8] sm:$0xff] %v1065
      %1105 = vst [vmem:[%s226 + $0xb0] sm:$0xff] %v1070
      %1106 = vst [vmem:[%s226 + $0xb8] sm:$0xff] %v1073
      %1107 = vst [vmem:[%s226 + $0xc0] sm:$0xff] %v1078
      %s1108 = smul.u32 25, %s16
      %p1109 = scmp.lt.s32.totalorder %s1108, 49
      %s1110 = scalar_select %p1109, %s1108, 49
      %s1111 = smul.addr %s1110, 8
      %s1112 = scalar_lea.vmem %s5, %s1111
      // Predicated region
      $region41: #{feed_forward.1} parent=39 // pred_check
        %p1113 = pneg %p144
      $region42: #{feed_forward.1} parent=39 // pred_check_branch
        %1115 = sbr.rel (%p1113) target = $region44
      $region43: #{feed_forward.1} parent=39 // pred_region
        %s1116 = smul.u32 25, %s16
      $region44: #{feed_forward.1} parent=39 // pred_fallthru
        _
    $region40: #{feed_forward.1} parent=5 // pred_fallthru
      _
    %p1117 = scmp.le.s32.totalorder 2, %s11
    // Predicated region
    $region45: #{feed_forward.1} parent=5 // pred_check
      %p1118 = pneg %p1117
    $region46: #{feed_forward.1} parent=5 // pred_check_branch
      %1120 = sbr.rel (%p1118) target = $region48
    $region47: #{feed_forward.1} parent=5 // pred_region
      %s1121 = ssub.s32 %s11, 2
      // Predicated region
      $region49: #{feed_forward.1} parent=47 // pred_check
        %p1122 = pneg %p150
      $region50: #{feed_forward.1} parent=47 // pred_check_branch
        %1124 = sbr.rel (%p1122) target = $region52
      $region51: #{feed_forward.1} parent=47 // pred_region
        %s1125 = smul.u32 25, %s17
        %p1126 = scmp.lt.s32.totalorder %s1125, 49
        %s1127 = scalar_select %p1126, %s1125, 49
        %s1128 = smul.addr %s1127, 8
        %s1129 = scalar_lea.vmem %s5, %s1128
      $region52: #{feed_forward.1} parent=47 // pred_fallthru
        _
    $region48: #{feed_forward.1} parent=5 // pred_fallthru
      _
  $region6: #{feed_forward.1} parent=0 // loop_footer
    %s15 = sadd.s32 1, %s11
  $region7: #{feed_forward.1} parent=0 // loop_footer_branch
    %10 = sbr.rel target = $region3
  $region8: #{feed_forward.1} parent=0 // loop_exit
    _

</llo_original>
